<compile_context>
chip_gen: v7x
topology: tpu7x:2x2x1
jax: 0.10.0
libtpu: 0.0.40
codegen_flags: <defaults>
</compile_context>

<pallas_src>
import functools

import jax
import jax.numpy as jnp
from jax import lax
from jax.experimental import pallas as pl
from jax.experimental.pallas import tpu as pltpu


def _round_up(x, n):
    return (x + n - 1) // n * n


def _am_softmax_kernel(label_ref, x_ref, w_ref, scale_ref, out_ref, *, s, m, tile_c, c_axis):
    """One (tile_b, tile_c) output tile of the AM-softmax logits."""
    c_idx = pl.program_id(c_axis)

    # bf16 MXU matmul, f32 accumulation.  scale = s / ||w_col|| was precomputed
    # in the wrapper, so   clip(dot * scale, -s, s) == s * clip(cos_theta, -1, 1).
    logits = jnp.dot(x_ref[...], w_ref[...], preferred_element_type=jnp.float32)
    logits = jnp.clip(logits * scale_ref[...], -s, s)

    # Additive margin on each row's target class.  Shift the labels into
    # tile-local column coordinates (a (tile_b, 1) subtract) instead of adding
    # the tile origin to the full (tile_b, tile_c) iota.
    local_label = label_ref[...] - c_idx * tile_c                  # (tile_b, 1) int32
    col_ids = lax.broadcasted_iota(jnp.int32, logits.shape, 1)     # (tile_b, tile_c)
    margin = jnp.where(col_ids == local_label, jnp.float32(s * m), jnp.float32(0.0))
    out_ref[...] = (logits - margin).astype(out_ref.dtype)


def am_softmax_forward(embeddings, label, weight, *, m=0.35, s=30.0,
                       tile_b=256, tile_c=1024, out_dtype=jnp.float32,
                       vmem_budget_bytes=40 * 1024 * 1024):
    """embeddings: (B, D) f32, label: (B,) int, weight: (D, C) f32 -> (B, C) out_dtype.

    Numerics note: MXU operands are cast to bf16 (f32 accumulation) — up to
    ~0.3 absolute error in the s=30-scaled logits vs a pure-f32 forward.
    """
    B, D = embeddings.shape
    D2, C = weight.shape
    assert D == D2
    out_bytes = jnp.dtype(out_dtype).itemsize

    # Lane/sublane-aligned tiles, shrunk for small problems.
    tile_c = min(tile_c, _round_up(C, 128))
    tile_b = min(tile_b, _round_up(B, 8))

    # Shrink tiles until the double-buffered working set fits the VMEM budget
    # (40 MiB default keeps headroom on v7x's 64 MiB; generous on v5e/v6e 128 MiB).
    def working_set(tb, tc):
        return (2 * D * tc * 2            # weight tile (bf16), double-buffered
                + 2 * tb * D * 2          # embeddings tile (bf16)
                + 2 * tb * tc * out_bytes  # output tile
                + 2 * tc * 4              # per-column scale (f32)
                + 2 * tb * 4)             # labels (int32)
    while tile_c > 128 and working_set(tile_b, tile_c) > vmem_budget_bytes:
        tile_c = max(128, _round_up(tile_c // 2, 128))
    while tile_b > 8 and working_set(tile_b, tile_c) > vmem_budget_bytes:
        tile_b = max(8, _round_up(tile_b // 2, 8))

    B_pad = _round_up(B, tile_b)
    C_pad = _round_up(C, tile_c)
    n_b = B_pad // tile_b
    n_c = C_pad // tile_c

    # Hoisted per-column scale: s / ||w_col||, f32, eps-guarded rsqrt.  XLA fuses
    # this with the bf16 cast below, so the f32 weight is read from HBM once.
    w32 = weight.astype(jnp.float32)
    scale = s * lax.rsqrt(jnp.sum(w32 * w32, axis=0, keepdims=True) + 1e-12)   # (1, C)

    # bf16 operands: halves HBM/VMEM traffic of the dominant (D, C) weight read
    # and doubles MXU throughput; accumulation stays f32 inside the kernel.
    x = embeddings.astype(jnp.bfloat16)
    w = weight.astype(jnp.bfloat16)
    lbl = label.reshape(B, 1).astype(jnp.int32)
    if B_pad != B:
        x = jnp.pad(x, ((0, B_pad - B), (0, 0)))
        lbl = jnp.pad(lbl, ((0, B_pad - B), (0, 0)))
    if C_pad != C:
        w = jnp.pad(w, ((0, 0), (0, C_pad - C)))
        # Padded columns get scale 0 -> logits exactly 0 (no inf/nan), and are
        # sliced away below anyway.
        scale = jnp.pad(scale, ((0, 0), (0, C_pad - C)))

    # Grid order from the data: the resident operand is the one that would be
    # expensive to re-read.  C-outer/B-inner keeps the weight tile resident
    # (embeddings re-read n_c times); B-outer/C-inner keeps the embeddings
    # resident (weight re-read n_b times).
    c_outer = (n_c * B_pad * D) <= (n_b * D * C_pad)
    if c_outer:
        grid = (n_c, n_b)
        c_axis = 0
        lbl_spec = pl.BlockSpec((tile_b, 1), lambda c, b: (b, 0))
        x_spec = pl.BlockSpec((tile_b, D), lambda c, b: (b, 0))
        w_spec = pl.BlockSpec((D, tile_c), lambda c, b: (0, c))
        sc_spec = pl.BlockSpec((1, tile_c), lambda c, b: (0, c))
        out_spec = pl.BlockSpec((tile_b, tile_c), lambda c, b: (b, c))
        in_bytes = D * C_pad * 2 + C_pad * 4 + n_c * (B_pad * D * 2 + B_pad * 4)
    else:
        grid = (n_b, n_c)
        c_axis = 1
        lbl_spec = pl.BlockSpec((tile_b, 1), lambda b, c: (b, 0))
        x_spec = pl.BlockSpec((tile_b, D), lambda b, c: (b, 0))
        w_spec = pl.BlockSpec((D, tile_c), lambda b, c: (0, c))
        sc_spec = pl.BlockSpec((1, tile_c), lambda b, c: (0, c))
        out_spec = pl.BlockSpec((tile_b, tile_c), lambda b, c: (b, c))
        in_bytes = B_pad * D * 2 + B_pad * 4 + n_b * (D * C_pad * 2 + C_pad * 4)

    kernel = functools.partial(_am_softmax_kernel, s=float(s), m=float(m),
                               tile_c=tile_c, c_axis=c_axis)

    out = pl.pallas_call(
        kernel,
        out_shape=jax.ShapeDtypeStruct((B_pad, C_pad), out_dtype),
        grid_spec=pltpu.PrefetchScalarGridSpec(
            num_scalar_prefetch=0,
            grid=grid,
            in_specs=[lbl_spec, x_spec, w_spec, sc_spec],
            out_specs=out_spec,
        ),
        compiler_params=pltpu.CompilerParams(
            # Norm hoisted to the wrapper -> no cross-step dependency left; both
            # axes are independent (each output tile written exactly once).
            dimension_semantics=("parallel", "parallel"),
            # 48 MiB: above the old 32 MiB binding limit, below v7x's 64 MiB VMEM.
            vmem_limit_bytes=48 * 1024 * 1024,
        ),
        cost_estimate=pl.CostEstimate(
            flops=2 * B_pad * D * C_pad,
            transcendentals=0,   # rsqrt now lives in the wrapper
            bytes_accessed=in_bytes + B_pad * C_pad * out_bytes,
        ),
    )(lbl, x, w, scale)

    return out[:B, :C]


if __name__ == "__main__":
    key = jax.random.PRNGKey(0)
    k_emb, k_w, k_lbl = jax.random.split(key, 3)

    B, D, C = 8, 32, 16          # batch, in_features, out_features (small test shapes)
    m, s = 0.35, 30.0

    embeddings = jax.random.normal(k_emb, (B, D), dtype=jnp.float32)
    # Parameter init (uniform(-1,1); the renorm/mul in __init__ is irrelevant
    # because the forward re-normalizes each column anyway).
    weight = jax.random.uniform(k_w, (D, C), dtype=jnp.float32, minval=-1.0, maxval=1.0)
    label = jax.random.randint(k_lbl, (B,), 0, C, dtype=jnp.int32)

    out = am_softmax_forward(embeddings, label, weight, m=m, s=s)
    out = jax.block_until_ready(out)

    one_hot = jax.nn.one_hot(label, C, dtype=bool)

    # Reference 1: mirrors the kernel's bf16-operand / f32-accumulate path.
    inv_norm = lax.rsqrt(
        jnp.sum(weight.astype(jnp.float32) ** 2, axis=0, keepdims=True) + 1e-12)
    cos_bf = jnp.clip(
        jnp.dot(embeddings.astype(jnp.bfloat16), weight.astype(jnp.bfloat16),
                preferred_element_type=jnp.float32) * inv_norm, -1.0, 1.0)
    ref_bf = jnp.where(one_hot, cos_bf - m, cos_bf) * s
    assert jnp.allclose(out, ref_bf, atol=5e-2, rtol=5e-2), "mismatch vs bf16 reference"

    # Reference 2: pure f32 math (PyTorch semantics); loose tolerance covers the
    # documented bf16 operand casts.
    w_norm = weight / jnp.linalg.norm(weight, axis=0, keepdims=True)
    cos32 = jnp.clip(embeddings @ w_norm, -1.0, 1.0)
    ref32 = jnp.where(one_hot, cos32 - m, cos32) * s
    assert jnp.allclose(out, ref32, atol=0.5), "mismatch vs f32 reference"

    print("KERNEL_OK")
</pallas_src>

<mosaic_0001>
module attributes {stable_mosaic.version = 11 : i64} {
  func.func @_am_softmax_kernel(%arg0: i32, %arg1: i32, %arg2: memref<8x1xi32, #tpu.memory_space<vmem>>, %arg3: memref<8x32xbf16, #tpu.memory_space<vmem>>, %arg4: memref<32x128xbf16, #tpu.memory_space<vmem>>, %arg5: memref<1x128xf32, #tpu.memory_space<vmem>>, %arg6: memref<8x128xf32, #tpu.memory_space<vmem>>) attributes {dimension_semantics = [#tpu.dimension_semantics<parallel>, #tpu.dimension_semantics<parallel>], iteration_bounds = array<i64: 1, 1>, scalar_prefetch = 0 : i64, scratch_operands = 0 : i64, tpu.core_type = #tpu.core_type<tc>, window_params = [{transform_indices = @transform_0, window_bounds = array<i64: 8, 1>}, {transform_indices = @transform_1, window_bounds = array<i64: 8, 32>}, {transform_indices = @transform_2, window_bounds = array<i64: 32, 128>}, {transform_indices = @transform_3, window_bounds = array<i64: 1, 128>}, {transform_indices = @transform_4, window_bounds = array<i64: 8, 128>}]} {
    %c0 = arith.constant 0 : index
    %c0_0 = arith.constant 0 : index
    %0 = vector.load %arg3[%c0, %c0_0] : memref<8x32xbf16, #tpu.memory_space<vmem>>, vector<8x32xbf16>
    %c0_1 = arith.constant 0 : index
    %c0_2 = arith.constant 0 : index
    %1 = vector.load %arg4[%c0_1, %c0_2] : memref<32x128xbf16, #tpu.memory_space<vmem>>, vector<32x128xbf16>
    %cst = arith.constant dense<0.000000e+00> : vector<8x128xf32>
    %2 = tpu.matmul %0, %1, %cst {dimension_numbers = #tpu.dot_dimension_numbers<[1], [0], [0], [1], [0, 0, 1, 1], [], []>} : vector<8x32xbf16>, vector<32x128xbf16>, vector<8x128xf32> -> vector<8x128xf32>
    %c0_3 = arith.constant 0 : index
    %c0_4 = arith.constant 0 : index
    %3 = vector.load %arg5[%c0_3, %c0_4] : memref<1x128xf32, #tpu.memory_space<vmem>>, vector<1x128xf32>
    %4 = vector.broadcast %3 : vector<1x128xf32> to vector<8x128xf32>
    %5 = arith.mulf %2, %4 : vector<8x128xf32>
    %cst_5 = arith.constant -3.000000e+01 : f32
    %cst_6 = arith.constant 3.000000e+01 : f32
    %6 = vector.broadcast %cst_5 : f32 to vector<8x128xf32>
    %7 = arith.maximumf %6, %5 : vector<8x128xf32>
    %8 = vector.broadcast %cst_6 : f32 to vector<8x128xf32>
    %9 = arith.minimumf %8, %7 : vector<8x128xf32>
    %c0_7 = arith.constant 0 : index
    %c0_8 = arith.constant 0 : index
    %10 = vector.load %arg2[%c0_7, %c0_8] : memref<8x1xi32, #tpu.memory_space<vmem>>, vector<8x1xi32>
    %c128_i32 = arith.constant 128 : i32
    %11 = arith.muli %arg0, %c128_i32 : i32
    %12 = vector.broadcast %11 : i32 to vector<8x1xi32>
    %13 = arith.subi %10, %12 : vector<8x1xi32>
    %14 = tpu.iota {dimensions = array<i32: 1>} : vector<8x128xi32>
    %15 = vector.broadcast %13 : vector<8x1xi32> to vector<8x128xi32>
    %16 = arith.cmpi eq, %14, %15 : vector<8x128xi32>
    %cst_9 = arith.constant 1.050000e+01 : f32
    %cst_10 = arith.constant 0.000000e+00 : f32
    %17 = vector.broadcast %cst_9 : f32 to vector<8x128xf32>
    %18 = vector.broadcast %cst_10 : f32 to vector<8x128xf32>
    %19 = arith.select %16, %17, %18 : vector<8x128xi1>, vector<8x128xf32>
    %20 = arith.subf %9, %19 : vector<8x128xf32>
    %c0_11 = arith.constant 0 : index
    %c0_12 = arith.constant 0 : index
    %21 = vector.load %arg6[%c0_11, %c0_12] : memref<8x128xf32, #tpu.memory_space<vmem>>, vector<8x128xf32>
    tpu.vector_store %arg6[%c0_11, %c0_12], %20 {strides = array<i32>} : memref<8x128xf32, #tpu.memory_space<vmem>>, vector<8x128xf32>,
    return
  }
  func.func @transform_0(%arg0: i32, %arg1: i32) -> (i32, i32) {
    %c0_i32 = arith.constant 0 : i32
    %c0_i32_0 = arith.constant 0 : i32
    return %arg1, %c0_i32 : i32, i32
  }
  func.func @transform_1(%arg0: i32, %arg1: i32) -> (i32, i32) {
    %c0_i32 = arith.constant 0 : i32
    %c0_i32_0 = arith.constant 0 : i32
    return %arg1, %c0_i32 : i32, i32
  }
  func.func @transform_2(%arg0: i32, %arg1: i32) -> (i32, i32) {
    %c0_i32 = arith.constant 0 : i32
    %c0_i32_0 = arith.constant 0 : i32
    return %c0_i32, %arg0 : i32, i32
  }
  func.func @transform_3(%arg0: i32, %arg1: i32) -> (i32, i32) {
    %c0_i32 = arith.constant 0 : i32
    %c0_i32_0 = arith.constant 0 : i32
    return %c0_i32, %arg0 : i32, i32
  }
  func.func @transform_4(%arg0: i32, %arg1: i32) -> (i32, i32) {
    %c0_i32 = arith.constant 0 : i32
    return %arg1, %arg0 : i32, i32
  }
}

</mosaic_0001>

<llo_original>
// kernel: tpu_custom_call.1
$region0: #{tpu_custom_call.1}
  #allocation0 [shape = 'u32[]', space=smem, size = 0x4, offset = 0x4, fixed_abs, tag = 'smem constant byte address 0x4 - core index']
  #allocation1 [shape = 'u32[144,128]{1,0:T(1,128)}', space=vmem, size = 0x12000, scoped, tag = 'internal scratch']
  %s0 = inlined_call_operand.vmem [shape: s32[8,1], index: 0, kind: input, shape index: {}]
  %s1 = inlined_call_operand.hbm [shape: bf16[8,32], index: 1, kind: input, shape index: {}]
  %s2 = inlined_call_operand.vmem [shape: bf16[32,128], index: 2, kind: input, shape index: {}]
  %s3 = inlined_call_operand.vmem [shape: f32[1,128], index: 3, kind: input, shape index: {}]
  %s4 = inlined_call_operand.hbm [shape: f32[8,128], index: 4, kind: output, shape index: {}]
  %s5 = sld [smem:[#allocation0]]
  $region30: #{tpu_custom_call.1} parent=0
    _
  %s7 = ssub.s32 1, %s5
  %s8 = scalar_select 0, %s7, %s5
  $region1: #{tpu_custom_call.1} parent=0
    #allocation2 [shape = 'u8[2048]{0}', space=vmem, size = 0x800, scoped, tag = 'input window, operand 1, single buffered']
    #allocation3 [shape = 's32[1]{0}', space=sflag, size = 0x4, scoped, tag = 'scoped memory for tpu_custom_call.1']
    #allocation4 [shape = 's32[1]{0}', space=sflag, size = 0x4, scoped, tag = 'scoped memory for tpu_custom_call.1']
    #allocation5 [shape = 'u8[4096]{0}', space=vmem, size = 0x1000, scoped, tag = 'output window, operand 0, single buffered']
    %9 = vsyncpa [#allocation3], 0
    %10 = vsyncpa [#allocation4], 0
    // Predicated region
    $region2: #{tpu_custom_call.1} parent=1 // pred_check
      _
    $region3: #{tpu_custom_call.1} parent=1 // pred_check_branch
      %12 = sbr.rel (0) target = $region5
    $region4: #{tpu_custom_call.1} parent=1 // pred_region
      _
    $region5: #{tpu_custom_call.1} parent=1 // pred_fallthru
      _
    // Predicated region
    $region6: #{tpu_custom_call.1} parent=1 // pred_check
      _
    $region7: #{tpu_custom_call.1} parent=1 // pred_check_branch
      %14 = sbr.rel (0) target = $region9
    $region8: #{tpu_custom_call.1} parent=1 // pred_region
      %s16 = ssub.s32 64, 64
      %17 = vsyncadd [#allocation3], %s16
      %s19 = sshll.u32 [#allocation2], 4
      %s20 = int_to_ptr.vmem [resolvable:$true] %s19
      %22 = dma.hbm_to_vmem [thread:$0]  %s1, 64, %s20, [#allocation3]
    $region9: #{tpu_custom_call.1} parent=1 // pred_fallthru
      _
    // Predicated region
    $region10: #{tpu_custom_call.1} parent=1 // pred_check
      _
    $region11: #{tpu_custom_call.1} parent=1 // pred_check_branch
      %24 = sbr.rel (0) target = $region13
    $region12: #{tpu_custom_call.1} parent=1 // pred_region
      _
    $region13: #{tpu_custom_call.1} parent=1 // pred_fallthru
      _
    // Predicated region
    $region14: #{tpu_custom_call.1} parent=1 // pred_check
      _
    $region15: #{tpu_custom_call.1} parent=1 // pred_check_branch
      %26 = sbr.rel (0) target = $region17
    $region16: #{tpu_custom_call.1} parent=1 // pred_region
      _
    $region17: #{tpu_custom_call.1} parent=1 // pred_fallthru
      _
    // Predicated region
    $region18: #{tpu_custom_call.1} parent=1 // pred_check
      _
    $region19: #{tpu_custom_call.1} parent=1 // pred_check_branch
      %28 = sbr.rel (0) target = $region21
    $region20: #{tpu_custom_call.1} parent=1 // pred_region
      %29 = dma.done [#allocation3], 64
    $region21: #{tpu_custom_call.1} parent=1 // pred_fallthru
      _
    %v31 = vld [vmem:[#allocation2] sm:$0xf]
    %v32 = vld [vmem:[%s2] sm:$0xf]
    %v33 = vld [vmem:[%s2 + $0x4] sm:$0xf]
    %v34 = vld [vmem:[%s2 + $0x8] sm:$0xf]
    %v35 = vld [vmem:[%s2 + $0xc] sm:$0xf]
    %v40 = vunpack.c.l.b16 %v32
    %v41 = vunpack.c.l.b16 %v33
    %v42 = vunpack.c.l.b16 %v34
    %v43 = vunpack.c.l.b16 %v35
    %v44 = vpack.c.b16 %v41, %v40
    %v45 = vpack.c.b16 %v43, %v42
    %vm48 = vcmask 261120
    %v50 = vsel %vm48, %v31, 0
    %52 = vmatprep.subr.bf16.mxu0 0
    %53 = vmatpush1.bf16.msra.mxu0 %v44
    %54 = vmatprep.subr.bf16.mxu0 0
    %55 = vmatpush1.bf16.msra.mxu0 %v45
    %56 = vmatprep.subr.bf16.mxu0 0
    %57 = vmatpush1.bf16.msra.mxu0 0
    %58 = vmatprep.subr.bf16.mxu0 0
    %59 = vmatpush1.bf16.msra.mxu0 0
    %60 = vmatprep.subr.bf16.mxu0 0
    %61 = vmatpush1.bf16.msra.mxu0 0
    %62 = vmatprep.subr.bf16.mxu0 0
    %63 = vmatpush1.bf16.msra.mxu0 0
    %64 = vmatprep.subr.bf16.mxu0 0
    %65 = vmatpush1.bf16.msra.mxu0 0
    %66 = vmatprep.subr.bf16.mxu0 0
    %67 = vmatpush1.bf16.msra.mxu0 0
    %68 = vmatprep.subr.bf16.mxu0 0
    %69 = vmatpush1.bf16.msra.mxu0 0
    %70 = vmatprep.subr.bf16.mxu0 0
    %71 = vmatpush1.bf16.msra.mxu0 0
    %72 = vmatprep.subr.bf16.mxu0 0
    %73 = vmatpush1.bf16.msra.mxu0 0
    %74 = vmatprep.subr.bf16.mxu0 0
    %75 = vmatpush1.bf16.msra.mxu0 0
    %76 = vmatprep.subr.bf16.mxu0 0
    %77 = vmatpush1.bf16.msra.mxu0 0
    %78 = vmatprep.subr.bf16.mxu0 0
    %79 = vmatpush1.bf16.msra.mxu0 0
    %80 = vmatprep.subr.bf16.mxu0 0
    %81 = vmatpush1.bf16.msra.mxu0 0
    %82 = vmatprep.subr.bf16.mxu0 0
    %83 = vmatpush1.bf16.msra.mxu0 0
    %84 = vmatprep.mubr.bf16.mxu0 0
    %85 = vmatmul.mubr.bf16.gmra.mrb[0].mxu0 %v50
    %v86 = vpop.f32.mrb[0].mxu0
    %v87 = vadd.f32 0.0, %v86
    %v88 = vpop.f32.mrb[0].mxu0
    %v89 = vpop.f32.mrb[0].mxu0
    %v90 = vpop.f32.mrb[0].mxu0
    %91 = vdwg.mxu0
    %v92 = vld [vmem:[%s3] sm:$0x1]
    %v94 = vlaneseq
    %v95 = vshrl.u32 %v94, 7
    %v96 = vsub.s32 0, %v95
    %v97 = vrot.slane %v92, %v96
    %v99 = vmul.f32 %v87, %v97
    %v100 = vmax.f32 %v99, -30.0
    %v101 = vmin.f32 %v100, 30.0
    %v102 = vld [vmem:[%s0] sm:$0xff]
    %s103 = smul.u32 0, 128
    %v104 = vstv %s103
    %v105 = vsub.s32 %v102, %v104
    %v106 = vlaneseq
    %v107 = vand.u32 %v106, 127
    %108 = vset.pattern.permute.xlu0 0
    %109 = vperm.xlu0 %108, %v105
    %v110 = vpop.permute.xlu0 %109
    %vm111 = vcmp.eq.s32.totalorder %v107, %v110
    %v112 = vsel %vm111, 10.5, 0.0
    %v113 = vsub.f32 %v101, %v112
    %114 = vst [vmem:[#allocation5] sm:$0xff] %v113
    // Predicated region
    $region22: #{tpu_custom_call.1} parent=1 // pred_check
      _
    $region23: #{tpu_custom_call.1} parent=1 // pred_check_branch
      %116 = sbr.rel (0) target = $region25
    $region24: #{tpu_custom_call.1} parent=1 // pred_region
      %s118 = ssub.s32 128, 128
      %119 = vsyncadd [#allocation4], %s118
      %s121 = sshll.u32 [#allocation5], 4
      %s122 = int_to_ptr.vmem [resolvable:$true] %s121
      %124 = dma.vmem_to_hbm [thread:$0]  %s122, 128, %s4, [#allocation4]
    $region25: #{tpu_custom_call.1} parent=1 // pred_fallthru
      _
    // Predicated region
    $region26: #{tpu_custom_call.1} parent=1 // pred_check
      _
    $region27: #{tpu_custom_call.1} parent=1 // pred_check_branch
      %126 = sbr.rel (0) target = $region29
    $region28: #{tpu_custom_call.1} parent=1 // pred_region
      %127 = dma.done [#allocation4], 128
    $region29: #{tpu_custom_call.1} parent=1 // pred_fallthru
      _
    %128 = vsyncpa [#allocation3], 1
    %129 = vsyncpa [#allocation4], 1

</llo_original>
